<compile_context>
chip_gen: v6e
topology: v6e:2x2x1
jax: 0.10.0
libtpu: 0.0.40
codegen_flags: <defaults>
</compile_context>

<pallas_src>
import functools

import jax
import jax.numpy as jnp
from jax.experimental import pallas as pl
from jax.experimental.pallas import tpu as pltpu

C = 64  # channel count hard-coded to 64 in the reference module (expand(-1, -1, 64))


def _round_up(a, b):
    return ((a + b - 1) // b) * b


def _scatter_add_kernel(occ_ref, idx_ref, x_ref, o_ref, acc_ref, *, tile_p, compute_dtype):
    # occ_ref: (B*ntp*ntn,) int32 in SMEM (scalar-prefetched occupancy table)
    # idx_ref: (1, tile_n, 1) int32 | x_ref: (1, tile_n, C) | o_ref: (1, C, tile_p)
    # acc_ref: (C, tile_p) f32 scratch accumulator (resident across the n axis)
    b = pl.program_id(0)
    p = pl.program_id(1)
    n = pl.program_id(2)
    ntp = pl.num_programs(1)
    ntn = pl.num_programs(2)

    @pl.when(n == 0)
    def _():
        acc_ref[...] = jnp.zeros_like(acc_ref)

    occupied = occ_ref[b * ntp * ntn + p * ntn + n] != 0

    @pl.when(occupied)
    def _():
        idx = idx_ref[0]                                   # (tile_n, 1) int32
        x = x_ref[0].astype(compute_dtype)                 # (tile_n, C)
        tile_n = x.shape[0]
        # global pillar ids covered by this pillar tile
        pillar_ids = (
            jax.lax.broadcasted_iota(jnp.int32, (tile_n, tile_p), 1) + p * tile_p
        )
        # points whose index falls outside this tile (incl. -1 padding) match nothing
        one_hot = (idx == pillar_ids).astype(compute_dtype)   # (tile_n, tile_p)

        # (C, tile_p) = x^T @ one_hot : contraction over the point axis -> MXU.
        contrib = jax.lax.dot_general(
            x, one_hot,
            dimension_numbers=(((0,), (0,)), ((), ())),
            preferred_element_type=jnp.float32,
        )
        acc_ref[...] += contrib

    @pl.when(n == ntn - 1)
    def _():
        o_ref[0] = acc_ref[...].astype(o_ref.dtype)


def pillar_feature_net_scatter(
    x, indices, n_pillars_x, n_pillars_y, *, tile_n=256, tile_p=2048, compute_dtype=None
):
    """x: (B, N, 64) float; indices: (B, N) int pillar ids in [0, nx*ny).

    Negative / padding indices contribute nothing (the reference assumes padded
    points carry zero features).
    """
    B, N, Cin = x.shape
    assert Cin == C, "reference module hard-codes 64 channels"
    P = n_pillars_x * n_pillars_y
    compute_dtype = jnp.dtype(compute_dtype) if compute_dtype is not None else x.dtype

    # ---- tile sizes & padding -------------------------------------------------
    tile_n = min(tile_n, _round_up(N, 8))
    assert tile_n % 8 == 0
    N_pad = _round_up(N, tile_n)

    tile_p = min(tile_p, _round_up(P, 128))
    P_pad = _round_up(P, tile_p)
    assert tile_p == P_pad or tile_p % 128 == 0

    idx = indices.astype(jnp.int32)
    if N_pad != N:
        x = jnp.pad(x, ((0, 0), (0, N_pad - N), (0, 0)))
        idx = jnp.pad(idx, ((0, 0), (0, N_pad - N)), constant_values=-1)

    n_tiles_n = N_pad // tile_n
    n_tiles_p = P_pad // tile_p

    # ---- occupancy table (scalar-prefetched to SMEM) --------------------------
    # occ[b, p_tile, n_tile] = 1 iff any point of n_tile maps into p_tile.
    tile_of_point = jnp.where(idx >= 0, idx // tile_p, -1)           # (B, N_pad)
    tile_of_point = tile_of_point.reshape(B, n_tiles_n, tile_n)
    occ = (
        tile_of_point[:, None, :, :]
        == jnp.arange(n_tiles_p, dtype=jnp.int32)[None, :, None, None]
    ).any(-1)
    occ = occ.astype(jnp.int32).reshape(-1)      # flat 1D -> tight SMEM padding

    idx3 = idx.reshape(B, N_pad, 1)

    kernel = functools.partial(
        _scatter_add_kernel, tile_p=tile_p, compute_dtype=compute_dtype
    )

    itemsize = jnp.dtype(x.dtype).itemsize
    vmem_est = (
        2 * tile_n * C * itemsize        # x double buffer
        + 2 * tile_n * 4                 # idx double buffer
        + 2 * C * tile_p * itemsize      # output double buffer
        + C * tile_p * 4                 # f32 accumulator scratch
        + 3 * tile_n * tile_p * 4        # one_hot / iota / contrib transients
    )
    vmem_limit = int(min(max(2 * vmem_est, 16 << 20), 64 << 20))

    cost = pl.CostEstimate(
        flops=2 * B * N_pad * C * P_pad,
        transcendentals=0,
        bytes_accessed=(
            x.size * itemsize + idx3.size * 4 + B * C * P_pad * itemsize + occ.size * 4
        ),
    )

    out = pl.pallas_call(
        kernel,
        out_shape=jax.ShapeDtypeStruct((B, C, P_pad), x.dtype),
        grid_spec=pltpu.PrefetchScalarGridSpec(
            num_scalar_prefetch=1,
            grid=(B, n_tiles_p, n_tiles_n),          # reduction axis (n) last
            in_specs=[
                pl.BlockSpec((1, tile_n, 1), lambda b, p, n, occ: (b, n, 0)),
                pl.BlockSpec((1, tile_n, C), lambda b, p, n, occ: (b, n, 0)),
            ],
            out_specs=pl.BlockSpec((1, C, tile_p), lambda b, p, n, occ: (b, 0, p)),
            scratch_shapes=[pltpu.VMEM((C, tile_p), jnp.float32)],
        ),
        compiler_params=pltpu.CompilerParams(
            dimension_semantics=("parallel", "parallel", "arbitrary"),
            vmem_limit_bytes=vmem_limit,
        ),
        cost_estimate=cost,
    )(occ, idx3, x)

    if P_pad != P:
        out = out[:, :, :P]
    # glue: == torch unflatten(2, (n_pillars_x, n_pillars_y)) after the permute
    return out.reshape(B, C, n_pillars_x, n_pillars_y)


if __name__ == "__main__":
    key = jax.random.PRNGKey(0)
    B, N = 2, 512
    n_x, n_y = 16, 16
    P = n_x * n_y

    kx, ki = jax.random.split(key)
    x = jax.random.normal(kx, (B, N, C), dtype=jnp.float32)
    indices = jax.random.randint(ki, (B, N), 0, P, dtype=jnp.int32)

    # small shapes but both tiling axes exercised: 2 pillar tiles x 2 point tiles
    out = pillar_feature_net_scatter(x, indices, n_x, n_y, tile_n=256, tile_p=128)
    out = jax.block_until_ready(out)

    # pure-JAX reference of the torch forward
    one_hot = jax.nn.one_hot(indices, P, dtype=x.dtype)            # (B, N, P)
    ref = jnp.einsum("bnp,bnc->bcp", one_hot, x).reshape(B, C, n_x, n_y)

    assert out.shape == (B, C, n_x, n_y)
    assert out.dtype == x.dtype
    assert jnp.allclose(out, ref, atol=1e-4, rtol=1e-4)
    print("KERNEL_OK")
</pallas_src>

<mosaic_0001>
module attributes {stable_mosaic.version = 11 : i64} {
  func.func @_scatter_add_kernel(%arg0: i32, %arg1: i32, %arg2: i32, %arg3: memref<8xi32, #tpu.memory_space<smem>>, %arg4: memref<1x256x1xi32, #tpu.memory_space<vmem>>, %arg5: memref<1x256x64xf32, #tpu.memory_space<vmem>>, %arg6: memref<1x64x128xf32, #tpu.memory_space<vmem>>, %arg7: memref<64x128xf32, #tpu.memory_space<vmem>>) attributes {dimension_semantics = [#tpu.dimension_semantics<parallel>, #tpu.dimension_semantics<parallel>, #tpu.dimension_semantics<arbitrary>], iteration_bounds = array<i64: 2, 2, 2>, scalar_prefetch = 1 : i64, scratch_operands = 1 : i64, tpu.core_type = #tpu.core_type<tc>, window_params = [{transform_indices = @transform_0, window_bounds = array<i64: 1, 256, 1>}, {transform_indices = @transform_1, window_bounds = array<i64: 1, 256, 64>}, {transform_indices = @transform_2, window_bounds = array<i64: 1, 64, 128>}]} {
    %c0_i32 = arith.constant 0 : i32
    %0 = arith.cmpi eq, %arg2, %c0_i32 : i32
    %1 = arith.extui %0 : i1 to i32
    %c0_i32_0 = arith.constant 0 : i32
    %2 = arith.cmpi ne, %1, %c0_i32_0 : i32
    scf.if %2 {
      %cst = arith.constant 0.000000e+00 : f32
      %16 = vector.broadcast %cst : f32 to vector<64x128xf32>
      %c0 = arith.constant 0 : index
      %c0_6 = arith.constant 0 : index
      %17 = vector.load %arg7[%c0, %c0_6] : memref<64x128xf32, #tpu.memory_space<vmem>>, vector<64x128xf32>
      tpu.vector_store %arg7[%c0, %c0_6], %16 {strides = array<i32>} : memref<64x128xf32, #tpu.memory_space<vmem>>, vector<64x128xf32>,
    } else {
    }
    %c2_i32 = arith.constant 2 : i32
    %3 = arith.muli %arg0, %c2_i32 : i32
    %c2_i32_1 = arith.constant 2 : i32
    %4 = arith.muli %3, %c2_i32_1 : i32
    %c2_i32_2 = arith.constant 2 : i32
    %5 = arith.muli %arg1, %c2_i32_2 : i32
    %6 = arith.addi %4, %5 : i32
    %7 = arith.addi %6, %arg2 : i32
    %8 = arith.index_cast %7 : i32 to index
    %9 = memref.load %arg3[%8] : memref<8xi32, #tpu.memory_space<smem>>
    %c0_i32_3 = arith.constant 0 : i32
    %10 = arith.cmpi ne, %9, %c0_i32_3 : i32
    %11 = arith.extui %10 : i1 to i32
    %c0_i32_4 = arith.constant 0 : i32
    %12 = arith.cmpi ne, %11, %c0_i32_4 : i32
    scf.if %12 {
      %c0 = arith.constant 0 : index
      %c0_6 = arith.constant 0 : index
      %c0_7 = arith.constant 0 : index
      %16 = vector.load %arg4[%c0, %c0_6, %c0_7] : memref<1x256x1xi32, #tpu.memory_space<vmem>>, vector<1x256x1xi32>
      %17 = vector.shape_cast %16 : vector<1x256x1xi32> to vector<256x1xi32>
      %c0_8 = arith.constant 0 : index
      %c0_9 = arith.constant 0 : index
      %c0_10 = arith.constant 0 : index
      %18 = vector.load %arg5[%c0_8, %c0_9, %c0_10] : memref<1x256x64xf32, #tpu.memory_space<vmem>>, vector<1x256x64xf32>
      %19 = vector.shape_cast %18 : vector<1x256x64xf32> to vector<256x64xf32>
      %20 = tpu.iota {dimensions = array<i32: 1>} : vector<256x128xi32>
      %c128_i32 = arith.constant 128 : i32
      %21 = arith.muli %arg1, %c128_i32 : i32
      %22 = vector.broadcast %21 : i32 to vector<256x128xi32>
      %23 = arith.addi %20, %22 : vector<256x128xi32>
      %24 = vector.broadcast %17 : vector<256x1xi32> to vector<256x128xi32>
      %25 = arith.cmpi eq, %24, %23 : vector<256x128xi32>
      %26 = arith.extui %25 : vector<256x128xi1> to vector<256x128xi32>
      %27 = arith.sitofp %26 : vector<256x128xi32> to vector<256x128xf32>
      %cst = arith.constant dense<0.000000e+00> : vector<64x128xf32>
      %28 = tpu.matmul %19, %27, %cst {dimension_numbers = #tpu.dot_dimension_numbers<[0], [0], [1], [1], [0, 1, 1, 1], [], []>} : vector<256x64xf32>, vector<256x128xf32>, vector<64x128xf32> -> vector<64x128xf32>
      %c0_11 = arith.constant 0 : index
      %c0_12 = arith.constant 0 : index
      %29 = vector.load %arg7[%c0_11, %c0_12] : memref<64x128xf32, #tpu.memory_space<vmem>>, vector<64x128xf32>
      %30 = arith.addf %29, %28 : vector<64x128xf32>
      %c0_13 = arith.constant 0 : index
      %c0_14 = arith.constant 0 : index
      %31 = vector.load %arg7[%c0_13, %c0_14] : memref<64x128xf32, #tpu.memory_space<vmem>>, vector<64x128xf32>
      tpu.vector_store %arg7[%c0_13, %c0_14], %30 {strides = array<i32>} : memref<64x128xf32, #tpu.memory_space<vmem>>, vector<64x128xf32>,
    } else {
    }
    %c1_i32 = arith.constant 1 : i32
    %13 = arith.cmpi eq, %arg2, %c1_i32 : i32
    %14 = arith.extui %13 : i1 to i32
    %c0_i32_5 = arith.constant 0 : i32
    %15 = arith.cmpi ne, %14, %c0_i32_5 : i32
    scf.if %15 {
      %c0 = arith.constant 0 : index
      %c0_6 = arith.constant 0 : index
      %16 = vector.load %arg7[%c0, %c0_6] : memref<64x128xf32, #tpu.memory_space<vmem>>, vector<64x128xf32>
      %c0_7 = arith.constant 0 : index
      %c0_8 = arith.constant 0 : index
      %c0_9 = arith.constant 0 : index
      %17 = vector.load %arg6[%c0_7, %c0_8, %c0_9] : memref<1x64x128xf32, #tpu.memory_space<vmem>>, vector<1x64x128xf32>
      %18 = vector.shape_cast %17 : vector<1x64x128xf32> to vector<64x128xf32>
      %19 = vector.shape_cast %16 : vector<64x128xf32> to vector<1x64x128xf32>
      tpu.vector_store %arg6[%c0_7, %c0_8, %c0_9], %19 {strides = array<i32>} : memref<1x64x128xf32, #tpu.memory_space<vmem>>, vector<1x64x128xf32>,
    } else {
    }
    return
  }
  func.func @transform_0(%arg0: i32, %arg1: i32, %arg2: i32, %arg3: memref<8xi32, #tpu.memory_space<smem>>) -> (i32, i32, i32) {
    %c0_i32 = arith.constant 0 : i32
    %c0_i32_0 = arith.constant 0 : i32
    return %arg0, %arg2, %c0_i32 : i32, i32, i32
  }
  func.func @transform_1(%arg0: i32, %arg1: i32, %arg2: i32, %arg3: memref<8xi32, #tpu.memory_space<smem>>) -> (i32, i32, i32) {
    %c0_i32 = arith.constant 0 : i32
    %c0_i32_0 = arith.constant 0 : i32
    return %arg0, %arg2, %c0_i32 : i32, i32, i32
  }
  func.func @transform_2(%arg0: i32, %arg1: i32, %arg2: i32, %arg3: memref<8xi32, #tpu.memory_space<smem>>) -> (i32, i32, i32) {
    %c0_i32 = arith.constant 0 : i32
    %c0_i32_0 = arith.constant 0 : i32
    return %arg0, %c0_i32, %arg1 : i32, i32, i32
  }
}

</mosaic_0001>

<llo_original>
// kernel: tpu_custom_call.1
$region0: #{tpu_custom_call.1}
  #allocation0 [shape = 'u32[]', space=smem, size = 0x4, offset = 0x4, fixed_abs, tag = 'smem constant byte address 0x4 - core index']
  #allocation1 [shape = 'u32[144,128]{1,0:T(1,128)}', space=vmem, size = 0x12000, scoped, tag = 'internal scratch']
  #allocation2 [shape = 'f32[64,128]{1,0:T(8,128)}', space=vmem, size = 0x8000, scoped, tag = 'scratch operand']
  #allocation3 [shape = 's32[1]{0}', space=sflag, size = 0x4, scoped, tag = 'scoped memory for tpu_custom_call.1']
  #allocation4 [shape = 'u8[512]{0}', space=smem, size = 0x200, scoped, tag = 'prefetched SMEM operand 0']
  %s0 = inlined_call_operand.vmem [shape: s32[8], index: 0, kind: input, shape index: {}]
  %s1 = inlined_call_operand.vmem [shape: s32[2,512,1], index: 1, kind: input, shape index: {}]
  %s2 = inlined_call_operand.vmem [shape: f32[2,512,64], index: 2, kind: input, shape index: {}]
  %s3 = inlined_call_operand.hbm [shape: f32[2,64,256], index: 3, kind: output, shape index: {}]
  %s4 = sld [smem:[#allocation0]]
  $region53: #{tpu_custom_call.1} parent=0
    _
  %s6 = ssub.s32 1, %s4
  %s7 = scalar_select 0, %s6, %s4
  %s8 = sshll.u32 %s0, 4
  %s9 = int_to_ptr.vmem [resolvable:$true] %s8
  %11 = dma.vmem_to_smem %s9, 16, [#allocation4], [#allocation3]
  %12 = dma.done [#allocation3], 16
  %13 = sfence
  $region1: #{tpu_custom_call.1} parent=0
    #allocation5 [shape = 'u8[65536]{0}', space=vmem, size = 0x10000, scoped, tag = 'output window, operand 0']
    #allocation6 [shape = 's32[2]{0}', space=sflag, size = 0x8, scoped, tag = 'scoped memory for tpu_custom_call.1']
    %14 = vsyncpa [#allocation6], 0
    %s15 = scalar_lea.sflag [#allocation6], 1
    %16 = vsyncpa %s15, 0
    loop: start=0, step=1, limit=10
    $region2: #{tpu_custom_call.1} parent=1 // loop_pre_header
      _
    $region3: #{tpu_custom_call.1} parent=1 // loop_header
      %s18 = sphi 0, %s22
      %p19 = scmp.ge.s32.totalorder %s18, 10
      %s25 = sphi 0, %s44
      %s26 = sphi 0, %s40
      %s27 = sphi 0, %s36
      %s28 = sphi 0, %s25
      %s29 = sphi 0, %s26
      %s30 = sphi 0, %s27
      %s31 = sphi 0, %s28
      %s32 = sphi 0, %s29
      %s33 = sphi 0, %s30
      %s49 = sphi 0, %s51
      %s52 = sphi 0, %s49
      %s53 = sphi 0, %s52
      %s69 = sphi 0, %s53
      %s77 = sphi 0, %s79
      %s80 = sphi 0, %s77
      %s81 = sphi 0, %s80
      %s97 = sphi 0, %s81
      %s105 = sphi 0, %s107
      %s108 = sphi 0, %s105
      %s109 = sphi 0, %s108
      %s125 = sphi 0, %s109
    $region4: #{tpu_custom_call.1} parent=1 // loop_header_branch
      %21 = sbr.rel (%p19) target = $region8
    $region5: #{tpu_custom_call.1} parent=1 // loop_body
      %s23 = ssub.s32 %s18, 1
      %s24 = ssub.s32 %s18, 2
      %s34 = sadd.s32 1, %s27
      %p35 = scmp.ge.s32.totalorder %s34, 2
      %s36 = scalar_select %p35, 0, %s34
      %s37 = sadd.s32 1, %s26
      %s38 = scalar_select %p35, %s37, %s26
      %p39 = scmp.ge.s32.totalorder %s38, 2
      %s40 = scalar_select %p39, 0, %s38
      %s41 = sadd.s32 1, %s25
      %s42 = scalar_select %p39, %s41, %s25
      %p43 = scmp.ge.s32.totalorder %s42, 2
      %s44 = scalar_select %p43, 0, %s42
      %s45 = ssub.s32 %s25, %s44
      %s46 = ssub.s32 %s27, %s36
      %s47 = sor.u32 %s45, %s46
      %p48 = scmp.eq.s32.totalorder %s47, 0
      %s50 = sadd.s32 %s49, 1
      %s51 = scalar_select %p48, %s49, %s50
      %p54 = pneg %p48
      %p55 = scmp.eq.s32.totalorder %s18, 7
      %p56 = por %p54, %p55
      %p57 = scmp.ne.s32.totalorder %s49, %s52
      %p58 = scmp.eq.s32.totalorder %s18, 0
      %p59 = por %p57, %p58
      %p60 = scmp.ne.s32.totalorder %s49, %s52
      %p61 = scmp.eq.s32.totalorder %s23, 7
      %p62 = por %p60, %p61
      %p63 = scmp.ne.s32.totalorder %s52, %s53
      %p64 = scmp.eq.s32.totalorder %s23, 0
      %p65 = por %p63, %p64
      %p66 = scmp.ne.s32.totalorder %s52, %s53
      %p67 = scmp.eq.s32.totalorder %s24, 7
      %p68 = por %p66, %p67
      %p70 = scmp.ne.s32.totalorder %s53, %s69
      %p71 = scmp.eq.s32.totalorder %s24, 0
      %p72 = por %p70, %p71
      %s73 = ssub.s32 %s25, %s44
      %s74 = ssub.s32 %s27, %s36
      %s75 = sor.u32 %s73, %s74
      %p76 = scmp.eq.s32.totalorder %s75, 0
      %s78 = sadd.s32 %s77, 1
      %s79 = scalar_select %p76, %s77, %s78
      %p82 = pneg %p76
      %p83 = scmp.eq.s32.totalorder %s18, 7
      %p84 = por %p82, %p83
      %p85 = scmp.ne.s32.totalorder %s77, %s80
      %p86 = scmp.eq.s32.totalorder %s18, 0
      %p87 = por %p85, %p86
      %p88 = scmp.ne.s32.totalorder %s77, %s80
      %p89 = scmp.eq.s32.totalorder %s23, 7
      %p90 = por %p88, %p89
      %p91 = scmp.ne.s32.totalorder %s80, %s81
      %p92 = scmp.eq.s32.totalorder %s23, 0
      %p93 = por %p91, %p92
      %p94 = scmp.ne.s32.totalorder %s80, %s81
      %p95 = scmp.eq.s32.totalorder %s24, 7
      %p96 = por %p94, %p95
      %p98 = scmp.ne.s32.totalorder %s81, %s97
      %p99 = scmp.eq.s32.totalorder %s24, 0
      %p100 = por %p98, %p99
      %s101 = ssub.s32 %s25, %s44
      %s102 = ssub.s32 %s26, %s40
      %s103 = sor.u32 %s101, %s102
      %p104 = scmp.eq.s32.totalorder %s103, 0
      %s106 = sadd.s32 %s105, 1
      %s107 = scalar_select %p104, %s105, %s106
      %p110 = pneg %p104
      %p111 = scmp.eq.s32.totalorder %s18, 7
      %p112 = por %p110, %p111
      %p113 = scmp.ne.s32.totalorder %s105, %s108
      %p114 = scmp.eq.s32.totalorder %s18, 0
      %p115 = por %p113, %p114
      %p116 = scmp.ne.s32.totalorder %s105, %s108
      %p117 = scmp.eq.s32.totalorder %s23, 7
      %p118 = por %p116, %p117
      %p119 = scmp.ne.s32.totalorder %s108, %s109
      %p120 = scmp.eq.s32.totalorder %s23, 0
      %p121 = por %p119, %p120
      %p122 = scmp.ne.s32.totalorder %s108, %s109
      %p123 = scmp.eq.s32.totalorder %s24, 7
      %p124 = por %p122, %p123
      %p126 = scmp.ne.s32.totalorder %s109, %s125
      %p127 = scmp.eq.s32.totalorder %s24, 0
      %p128 = por %p126, %p127
      %p129 = scmp.le.s32.totalorder 1, %s18
      %p130 = scmp.lt.s32.totalorder %s18, 9
      %p131 = pnand %p129, %p130
      %p132 = pneg %p131
      // Predicated region
      $region9: #{tpu_custom_call.1} parent=5 // pred_check
        _
      $region10: #{tpu_custom_call.1} parent=5 // pred_check_branch
        %134 = sbr.rel (%p131) target = $region12
      $region11: #{tpu_custom_call.1} parent=5 // pred_region
        %s135 = ssub.s32 %s18, 1
      $region12: #{tpu_custom_call.1} parent=5 // pred_fallthru
        _
      %p136 = scmp.lt.s32.totalorder %s18, 8
      // Predicated region
      $region13: #{tpu_custom_call.1} parent=5 // pred_check
        %p137 = pneg %p136
      $region14: #{tpu_custom_call.1} parent=5 // pred_check_branch
        %139 = sbr.rel (%p137) target = $region16
      $region15: #{tpu_custom_call.1} parent=5 // pred_region
        // Predicated region
        $region17: #{tpu_custom_call.1} parent=15 // pred_check
          %p140 = pneg %p59
        $region18: #{tpu_custom_call.1} parent=15 // pred_check_branch
          %142 = sbr.rel (%p140) target = $region20
        $region19: #{tpu_custom_call.1} parent=15 // pred_region
          %s143 = smul.u32 32, %s27
          %p144 = scmp.lt.s32.totalorder %s25, 1
          %s145 = scalar_select %p144, %s25, 1
          %p146 = scmp.lt.s32.totalorder %s143, 63
          %s147 = scalar_select %p146, %s143, 63
          %s148 = smul.addr %s145, 64
          %s149 = sadd.s32 %s147, %s148
          %s150 = smul.addr %s149, 8
          %s151 = scalar_lea.vmem %s1, %s150
          %s152 = smul.u32 32, %s27
        $region20: #{tpu_custom_call.1} parent=15 // pred_fallthru
          _
        // Predicated region
        $region21: #{tpu_custom_call.1} parent=15 // pred_check
          %p153 = pneg %p87
        $region22: #{tpu_custom_call.1} parent=15 // pred_check_branch
          %155 = sbr.rel (%p153) target = $region24
        $region23: #{tpu_custom_call.1} parent=15 // pred_region
          %s156 = smul.u32 32, %s27
          %p157 = scmp.lt.s32.totalorder %s25, 1
          %s158 = scalar_select %p157, %s25, 1
          %p159 = scmp.lt.s32.totalorder %s156, 63
          %s160 = scalar_select %p159, %s156, 63
          %s161 = smul.addr %s158, 64
          %s162 = sadd.s32 %s160, %s161
          %s163 = smul.addr %s162, 8
          %s164 = scalar_lea.vmem %s2, %s163
          %s165 = smul.u32 32, %s27
        $region24: #{tpu_custom_call.1} parent=15 // pred_fallthru
          _
      $region16: #{tpu_custom_call.1} parent=5 // pred_fallthru
        _
      %p166 = scmp.le.s32.totalorder 1, %s18
      %p167 = scmp.lt.s32.totalorder %s18, 9
      %p168 = pnand %p166, %p167
      %p169 = pneg %p168
      // Predicated region
      $region25: #{tpu_custom_call.1} parent=5 // pred_check
        _
      $region26: #{tpu_custom_call.1} parent=5 // pred_check_branch
        %171 = sbr.rel (%p168) target = $region28
      $region27: #{tpu_custom_call.1} parent=5 // pred_region
        %s172 = ssub.s32 %s18, 1
        %s173 = smul.u32 32, %s30
        %p174 = scmp.lt.s32.totalorder %s28, 1
        %s175 = scalar_select %p174, %s28, 1
        %p176 = scmp.lt.s32.totalorder %s173, 63
        %s177 = scalar_select %p176, %s173, 63
        %s178 = smul.addr %s175, 64
        %s179 = sadd.s32 %s177, %s178
        %s180 = smul.addr %s179, 8
        %s181 = scalar_lea.vmem %s1, %s180
        %p182 = pneg %p65
        %p183 = pneg %p62
        %s184 = smul.u32 32, %s30
        %p185 = scmp.lt.s32.totalorder %s28, 1
        %s186 = scalar_select %p185, %s28, 1
        %p187 = scmp.lt.s32.totalorder %s184, 63
        %s188 = scalar_select %p187, %s184, 63
        %s189 = smul.addr %s186, 64
        %s190 = sadd.s32 %s188, %s189
        %s191 = smul.addr %s190, 8
        %s192 = scalar_lea.vmem %s2, %s191
        %p193 = pneg %p93
        %p194 = pneg %p90
        %p195 = pneg %p121
        %p196 = pneg %p118
        %s197 = sand.u32 %s108, 1
        %s198 = scalar_lea.sflag [#allocation6], %s197
        %s199 = sand.u32 %s108, 1
        %s200 = smul.addr %s199, 64
        %s201 = scalar_lea.vmem [#allocation5], %s200
        %s202 = smul.u32 32, %s30
        %p203 = scmp.lt.s32.totalorder %s28, 1
        %s204 = scalar_select %p203, %s28, 1
        %p205 = scmp.lt.s32.totalorder %s202, 63
        %s206 = scalar_select %p205, %s202, 63
        %s207 = smul.addr %s204, 64
        %s208 = sadd.s32 %s206, %s207
        %s209 = smul.addr %s208, 8
        %s210 = scalar_lea.vmem %s1, %s209
        %s211 = smul.u32 32, %s30
        %s212 = smul.u32 32, %s30
        %p213 = scmp.lt.s32.totalorder %s28, 1
        %s214 = scalar_select %p213, %s28, 1
        %p215 = scmp.lt.s32.totalorder %s212, 63
        %s216 = scalar_select %p215, %s212, 63
        %s217 = smul.addr %s214, 64
        %s218 = sadd.s32 %s216, %s217
        %s219 = smul.addr %s218, 8
        %s220 = scalar_lea.vmem %s2, %s219
        %s221 = smul.u32 32, %s30
        %p222 = scmp.eq.s32.totalorder %s30, 0
        // Predicated region
        $region29: #{tpu_custom_call.1} parent=27 // pred_check
          %p223 = pneg %p222
        $region30: #{tpu_custom_call.1} parent=27 // pred_check_branch
          %225 = sbr.rel (%p223) target = $region32
        $region31: #{tpu_custom_call.1} parent=27 // pred_region
          %226 = vst [vmem:[#allocation2] sm:$0xff] 0.0
          %227 = vst [vmem:[#allocation2 + $0x8] sm:$0xff] 0.0
          %228 = vst [vmem:[#allocation2 + $0x10] sm:$0xff] 0.0
          %229 = vst [vmem:[#allocation2 + $0x18] sm:$0xff] 0.0
          %230 = vst [vmem:[#allocation2 + $0x20] sm:$0xff] 0.0
          %231 = vst [vmem:[#allocation2 + $0x28] sm:$0xff] 0.0
          %232 = vst [vmem:[#allocation2 + $0x30] sm:$0xff] 0.0
          %233 = vst [vmem:[#allocation2 + $0x38] sm:$0xff] 0.0
        $region32: #{tpu_custom_call.1} parent=27 // pred_fallthru
          _
        %s234 = smul.u32 %s28, 4
        %s235 = smul.u32 %s29, 2
        %s236 = sadd.s32 %s234, %s235
        %s237 = sadd.s32 %s236, %s30
        %s238 = sld [smem:[#allocation4 + %s237]]
        %p239 = scmp.ne.s32.totalorder %s238, 0
        // Predicated region
        $region33: #{tpu_custom_call.1} parent=27 // pred_check
          %p240 = pneg %p239
        $region34: #{tpu_custom_call.1} parent=27 // pred_check_branch
          %242 = sbr.rel (%p240) target = $region36
        $region35: #{tpu_custom_call.1} parent=27 // pred_region
          %v243 = vld [vmem:[%s210] sm:$0xff]
          %v244 = vld [vmem:[%s210 + $0x8] sm:$0xff]
          %v245 = vld [vmem:[%s210 + $0x10] sm:$0xff]
          %v246 = vld [vmem:[%s210 + $0x18] sm:$0xff]
          %v247 = vld [vmem:[%s210 + $0x20] sm:$0xff]
          %v248 = vld [vmem:[%s210 + $0x28] sm:$0xff]
          %v249 = vld [vmem:[%s210 + $0x30] sm:$0xff]
          %v250 = vld [vmem:[%s210 + $0x38] sm:$0xff]
          %v251 = vld [vmem:[%s210 + $0x40] sm:$0xff]
          %v252 = vld [vmem:[%s210 + $0x48] sm:$0xff]
          %v253 = vld [vmem:[%s210 + $0x50] sm:$0xff]
          %v254 = vld [vmem:[%s210 + $0x58] sm:$0xff]
          %v255 = vld [vmem:[%s210 + $0x60] sm:$0xff]
          %v256 = vld [vmem:[%s210 + $0x68] sm:$0xff]
          %v257 = vld [vmem:[%s210 + $0x70] sm:$0xff]
          %v258 = vld [vmem:[%s210 + $0x78] sm:$0xff]
          %v259 = vld [vmem:[%s210 + $0x80] sm:$0xff]
          %v260 = vld [vmem:[%s210 + $0x88] sm:$0xff]
          %v261 = vld [vmem:[%s210 + $0x90] sm:$0xff]
          %v262 = vld [vmem:[%s210 + $0x98] sm:$0xff]
          %v263 = vld [vmem:[%s210 + $0xa0] sm:$0xff]
          %v264 = vld [vmem:[%s210 + $0xa8] sm:$0xff]
          %v265 = vld [vmem:[%s210 + $0xb0] sm:$0xff]
          %v266 = vld [vmem:[%s210 + $0xb8] sm:$0xff]
          %v267 = vld [vmem:[%s210 + $0xc0] sm:$0xff]
          %v268 = vld [vmem:[%s210 + $0xc8] sm:$0xff]
          %v269 = vld [vmem:[%s210 + $0xd0] sm:$0xff]
          %v270 = vld [vmem:[%s210 + $0xd8] sm:$0xff]
          %v271 = vld [vmem:[%s210 + $0xe0] sm:$0xff]
          %v272 = vld [vmem:[%s210 + $0xe8] sm:$0xff]
          %v273 = vld [vmem:[%s210 + $0xf0] sm:$0xff]
          %v274 = vld [vmem:[%s210 + $0xf8] sm:$0xff]
          %v275 = vld [vmem:[%s220] sm:$0xff]
          %v276 = vld [vmem:[%s220 + $0x8] sm:$0xff]
          %v277 = vld [vmem:[%s220 + $0x10] sm:$0xff]
          %v278 = vld [vmem:[%s220 + $0x18] sm:$0xff]
          %v279 = vld [vmem:[%s220 + $0x20] sm:$0xff]
          %v280 = vld [vmem:[%s220 + $0x28] sm:$0xff]
          %v281 = vld [vmem:[%s220 + $0x30] sm:$0xff]
          %v282 = vld [vmem:[%s220 + $0x38] sm:$0xff]
          %v283 = vld [vmem:[%s220 + $0x40] sm:$0xff]
          %v284 = vld [vmem:[%s220 + $0x48] sm:$0xff]
          %v285 = vld [vmem:[%s220 + $0x50] sm:$0xff]
          %v286 = vld [vmem:[%s220 + $0x58] sm:$0xff]
          %v287 = vld [vmem:[%s220 + $0x60] sm:$0xff]
          %v288 = vld [vmem:[%s220 + $0x68] sm:$0xff]
          %v289 = vld [vmem:[%s220 + $0x70] sm:$0xff]
          %v290 = vld [vmem:[%s220 + $0x78] sm:$0xff]
          %v291 = vld [vmem:[%s220 + $0x80] sm:$0xff]
          %v292 = vld [vmem:[%s220 + $0x88] sm:$0xff]
          %v293 = vld [vmem:[%s220 + $0x90] sm:$0xff]
          %v294 = vld [vmem:[%s220 + $0x98] sm:$0xff]
          %v295 = vld [vmem:[%s220 + $0xa0] sm:$0xff]
          %v296 = vld [vmem:[%s220 + $0xa8] sm:$0xff]
          %v297 = vld [vmem:[%s220 + $0xb0] sm:$0xff]
          %v298 = vld [vmem:[%s220 + $0xb8] sm:$0xff]
          %v299 = vld [vmem:[%s220 + $0xc0] sm:$0xff]
          %v300 = vld [vmem:[%s220 + $0xc8] sm:$0xff]
          %v301 = vld [vmem:[%s220 + $0xd0] sm:$0xff]
          %v302 = vld [vmem:[%s220 + $0xd8] sm:$0xff]
          %v303 = vld [vmem:[%s220 + $0xe0] sm:$0xff]
          %v304 = vld [vmem:[%s220 + $0xe8] sm:$0xff]
          %v305 = vld [vmem:[%s220 + $0xf0] sm:$0xff]
          %v306 = vld [vmem:[%s220 + $0xf8] sm:$0xff]
          %v307 = vlaneseq
          %v308 = vand.u32 %v307, 127
          %s309 = smul.u32 %s29, 128
          %v310 = vstv %s309
          %v311 = vadd.s32 %v308, %v310
          %312 = vset.pattern.permute.xlu0 0
          %313 = vperm.xlu0 %312, %v243
          %v314 = vpop.permute.xlu0 %313
          %315 = vset.pattern.permute.xlu0 0
          %316 = vperm.xlu0 %315, %v244
          %v317 = vpop.permute.xlu0 %316
          %318 = vset.pattern.permute.xlu0 0
          %319 = vperm.xlu0 %318, %v245
          %v320 = vpop.permute.xlu0 %319
          %321 = vset.pattern.permute.xlu0 0
          %322 = vperm.xlu0 %321, %v246
          %v323 = vpop.permute.xlu0 %322
          %324 = vset.pattern.permute.xlu0 0
          %325 = vperm.xlu0 %324, %v247
          %v326 = vpop.permute.xlu0 %325
          %327 = vset.pattern.permute.xlu0 0
          %328 = vperm.xlu0 %327, %v248
          %v329 = vpop.permute.xlu0 %328
          %330 = vset.pattern.permute.xlu0 0
          %331 = vperm.xlu0 %330, %v249
          %v332 = vpop.permute.xlu0 %331
          %333 = vset.pattern.permute.xlu0 0
          %334 = vperm.xlu0 %333, %v250
          %v335 = vpop.permute.xlu0 %334
          %336 = vset.pattern.permute.xlu0 0
          %337 = vperm.xlu0 %336, %v251
          %v338 = vpop.permute.xlu0 %337
          %339 = vset.pattern.permute.xlu0 0
          %340 = vperm.xlu0 %339, %v252
          %v341 = vpop.permute.xlu0 %340
          %342 = vset.pattern.permute.xlu0 0
          %343 = vperm.xlu0 %342, %v253
          %v344 = vpop.permute.xlu0 %343
          %345 = vset.pattern.permute.xlu0 0
          %346 = vperm.xlu0 %345, %v254
          %v347 = vpop.permute.xlu0 %346
          %348 = vset.pattern.permute.xlu0 0
          %349 = vperm.xlu0 %348, %v255
          %v350 = vpop.permute.xlu0 %349
          %351 = vset.pattern.permute.xlu0 0
          %352 = vperm.xlu0 %351, %v256
          %v353 = vpop.permute.xlu0 %352
          %354 = vset.pattern.permute.xlu0 0
          %355 = vperm.xlu0 %354, %v257
          %v356 = vpop.permute.xlu0 %355
          %357 = vset.pattern.permute.xlu0 0
          %358 = vperm.xlu0 %357, %v258
          %v359 = vpop.permute.xlu0 %358
          %360 = vset.pattern.permute.xlu0 0
          %361 = vperm.xlu0 %360, %v259
          %v362 = vpop.permute.xlu0 %361
          %363 = vset.pattern.permute.xlu0 0
          %364 = vperm.xlu0 %363, %v260
          %v365 = vpop.permute.xlu0 %364
          %366 = vset.pattern.permute.xlu0 0
          %367 = vperm.xlu0 %366, %v261
          %v368 = vpop.permute.xlu0 %367
          %369 = vset.pattern.permute.xlu0 0
          %370 = vperm.xlu0 %369, %v262
          %v371 = vpop.permute.xlu0 %370
          %372 = vset.pattern.permute.xlu0 0
          %373 = vperm.xlu0 %372, %v263
          %v374 = vpop.permute.xlu0 %373
          %375 = vset.pattern.permute.xlu0 0
          %376 = vperm.xlu0 %375, %v264
          %v377 = vpop.permute.xlu0 %376
          %378 = vset.pattern.permute.xlu0 0
          %379 = vperm.xlu0 %378, %v265
          %v380 = vpop.permute.xlu0 %379
          %381 = vset.pattern.permute.xlu0 0
          %382 = vperm.xlu0 %381, %v266
          %v383 = vpop.permute.xlu0 %382
          %384 = vset.pattern.permute.xlu0 0
          %385 = vperm.xlu0 %384, %v267
          %v386 = vpop.permute.xlu0 %385
          %387 = vset.pattern.permute.xlu0 0
          %388 = vperm.xlu0 %387, %v268
          %v389 = vpop.permute.xlu0 %388
          %390 = vset.pattern.permute.xlu0 0
          %391 = vperm.xlu0 %390, %v269
          %v392 = vpop.permute.xlu0 %391
          %393 = vset.pattern.permute.xlu0 0
          %394 = vperm.xlu0 %393, %v270
          %v395 = vpop.permute.xlu0 %394
          %396 = vset.pattern.permute.xlu0 0
          %397 = vperm.xlu0 %396, %v271
          %v398 = vpop.permute.xlu0 %397
          %399 = vset.pattern.permute.xlu0 0
          %400 = vperm.xlu0 %399, %v272
          %v401 = vpop.permute.xlu0 %400
          %402 = vset.pattern.permute.xlu0 0
          %403 = vperm.xlu0 %402, %v273
          %v404 = vpop.permute.xlu0 %403
          %405 = vset.pattern.permute.xlu0 0
          %406 = vperm.xlu0 %405, %v274
          %v407 = vpop.permute.xlu0 %406
          %vm408 = vcmp.eq.s32.totalorder %v314, %v311
          %vm409 = vcmp.eq.s32.totalorder %v317, %v311
          %vm410 = vcmp.eq.s32.totalorder %v320, %v311
          %vm411 = vcmp.eq.s32.totalorder %v323, %v311
          %vm412 = vcmp.eq.s32.totalorder %v326, %v311
          %vm413 = vcmp.eq.s32.totalorder %v329, %v311
          %vm414 = vcmp.eq.s32.totalorder %v332, %v311
          %vm415 = vcmp.eq.s32.totalorder %v335, %v311
          %vm416 = vcmp.eq.s32.totalorder %v338, %v311
          %vm417 = vcmp.eq.s32.totalorder %v341, %v311
          %vm418 = vcmp.eq.s32.totalorder %v344, %v311
          %vm419 = vcmp.eq.s32.totalorder %v347, %v311
          %vm420 = vcmp.eq.s32.totalorder %v350, %v311
          %vm421 = vcmp.eq.s32.totalorder %v353, %v311
          %vm422 = vcmp.eq.s32.totalorder %v356, %v311
          %vm423 = vcmp.eq.s32.totalorder %v359, %v311
          %vm424 = vcmp.eq.s32.totalorder %v362, %v311
          %vm425 = vcmp.eq.s32.totalorder %v365, %v311
          %vm426 = vcmp.eq.s32.totalorder %v368, %v311
          %vm427 = vcmp.eq.s32.totalorder %v371, %v311
          %vm428 = vcmp.eq.s32.totalorder %v374, %v311
          %vm429 = vcmp.eq.s32.totalorder %v377, %v311
          %vm430 = vcmp.eq.s32.totalorder %v380, %v311
          %vm431 = vcmp.eq.s32.totalorder %v383, %v311
          %vm432 = vcmp.eq.s32.totalorder %v386, %v311
          %vm433 = vcmp.eq.s32.totalorder %v389, %v311
          %vm434 = vcmp.eq.s32.totalorder %v392, %v311
          %vm435 = vcmp.eq.s32.totalorder %v395, %v311
          %vm436 = vcmp.eq.s32.totalorder %v398, %v311
          %vm437 = vcmp.eq.s32.totalorder %v401, %v311
          %vm438 = vcmp.eq.s32.totalorder %v404, %v311
          %vm439 = vcmp.eq.s32.totalorder %v407, %v311
          %v440 = vsel %vm408, 1, 0
          %v441 = vsel %vm409, 1, 0
          %v442 = vsel %vm410, 1, 0
          %v443 = vsel %vm411, 1, 0
          %v444 = vsel %vm412, 1, 0
          %v445 = vsel %vm413, 1, 0
          %v446 = vsel %vm414, 1, 0
          %v447 = vsel %vm415, 1, 0
          %v448 = vsel %vm416, 1, 0
          %v449 = vsel %vm417, 1, 0
          %v450 = vsel %vm418, 1, 0
          %v451 = vsel %vm419, 1, 0
          %v452 = vsel %vm420, 1, 0
          %v453 = vsel %vm421, 1, 0
          %v454 = vsel %vm422, 1, 0
          %v455 = vsel %vm423, 1, 0
          %v456 = vsel %vm424, 1, 0
          %v457 = vsel %vm425, 1, 0
          %v458 = vsel %vm426, 1, 0
          %v459 = vsel %vm427, 1, 0
          %v460 = vsel %vm428, 1, 0
          %v461 = vsel %vm429, 1, 0
          %v462 = vsel %vm430, 1, 0
          %v463 = vsel %vm431, 1, 0
          %v464 = vsel %vm432, 1, 0
          %v465 = vsel %vm433, 1, 0
          %v466 = vsel %vm434, 1, 0
          %v467 = vsel %vm435, 1, 0
          %v468 = vsel %vm436, 1, 0
          %v469 = vsel %vm437, 1, 0
          %v470 = vsel %vm438, 1, 0
          %v471 = vsel %vm439, 1, 0
          %v472 = vcvt.s32.f32 %v440
          %v473 = vcvt.s32.f32 %v441
          %v474 = vcvt.s32.f32 %v442
          %v475 = vcvt.s32.f32 %v443
          %v476 = vcvt.s32.f32 %v444
          %v477 = vcvt.s32.f32 %v445
          %v478 = vcvt.s32.f32 %v446
          %v479 = vcvt.s32.f32 %v447
          %v480 = vcvt.s32.f32 %v448
          %v481 = vcvt.s32.f32 %v449
          %v482 = vcvt.s32.f32 %v450
          %v483 = vcvt.s32.f32 %v451
          %v484 = vcvt.s32.f32 %v452
          %v485 = vcvt.s32.f32 %v453
          %v486 = vcvt.s32.f32 %v454
          %v487 = vcvt.s32.f32 %v455
          %v488 = vcvt.s32.f32 %v456
          %v489 = vcvt.s32.f32 %v457
          %v490 = vcvt.s32.f32 %v458
          %v491 = vcvt.s32.f32 %v459
          %v492 = vcvt.s32.f32 %v460
          %v493 = vcvt.s32.f32 %v461
          %v494 = vcvt.s32.f32 %v462
          %v495 = vcvt.s32.f32 %v463
          %v496 = vcvt.s32.f32 %v464
          %v497 = vcvt.s32.f32 %v465
          %v498 = vcvt.s32.f32 %v466
          %v499 = vcvt.s32.f32 %v467
          %v500 = vcvt.s32.f32 %v468
          %v501 = vcvt.s32.f32 %v469
          %v502 = vcvt.s32.f32 %v470
          %v503 = vcvt.s32.f32 %v471
          %504 = vxpose.xlu0.b32.start [1/16] %v275, 128
          %505 = vxpose.xlu0.b32.cont [2/16] %v276, 128
          %506 = vxpose.xlu0.b32.cont [3/16] %v277, 128
          %507 = vxpose.xlu0.b32.cont [4/16] %v278, 128
          %508 = vxpose.xlu0.b32.cont [5/16] %v279, 128
          %509 = vxpose.xlu0.b32.cont [6/16] %v280, 128
          %510 = vxpose.xlu0.b32.cont [7/16] %v281, 128
          %511 = vxpose.xlu0.b32.cont [8/16] %v282, 128
          %512 = vxpose.xlu0.b32.cont [9/16] %v283, 128
          %513 = vxpose.xlu0.b32.cont [10/16] %v284, 128
          %514 = vxpose.xlu0.b32.cont [11/16] %v285, 128
          %515 = vxpose.xlu0.b32.cont [12/16] %v286, 128
          %516 = vxpose.xlu0.b32.cont [13/16] %v287, 128
          %517 = vxpose.xlu0.b32.cont [14/16] %v288, 128
          %518 = vxpose.xlu0.b32.cont [15/16] %v289, 128
          %519 = vxpose.xlu0.b32.end [16/16] %v290, 128
          %v520 = vpop.trf.xlu0
          %v521 = vpop.trf.xlu0
          %v522 = vpop.trf.xlu0
          %v523 = vpop.trf.xlu0
          %v524 = vpop.trf.xlu0
          %v525 = vpop.trf.xlu0
          %v526 = vpop.trf.xlu0
          %v527 = vpop.trf.xlu0
          %v528 = vpop.trf.xlu0
          %v529 = vpop.trf.xlu0
          %v530 = vpop.trf.xlu0
          %v531 = vpop.trf.xlu0
          %v532 = vpop.trf.xlu0
          %v533 = vpop.trf.xlu0
          %v534 = vpop.trf.xlu0
          %v535 = vpop.trf.xlu0
          %536 = vxpose.xlu0.b32.start [1/16] %v291, 128
          %537 = vxpose.xlu0.b32.cont [2/16] %v292, 128
          %538 = vxpose.xlu0.b32.cont [3/16] %v293, 128
          %539 = vxpose.xlu0.b32.cont [4/16] %v294, 128
          %540 = vxpose.xlu0.b32.cont [5/16] %v295, 128
          %541 = vxpose.xlu0.b32.cont [6/16] %v296, 128
          %542 = vxpose.xlu0.b32.cont [7/16] %v297, 128
          %543 = vxpose.xlu0.b32.cont [8/16] %v298, 128
          %544 = vxpose.xlu0.b32.cont [9/16] %v299, 128
          %545 = vxpose.xlu0.b32.cont [10/16] %v300, 128
          %546 = vxpose.xlu0.b32.cont [11/16] %v301, 128
          %547 = vxpose.xlu0.b32.cont [12/16] %v302, 128
          %548 = vxpose.xlu0.b32.cont [13/16] %v303, 128
          %549 = vxpose.xlu0.b32.cont [14/16] %v304, 128
          %550 = vxpose.xlu0.b32.cont [15/16] %v305, 128
          %551 = vxpose.xlu0.b32.end [16/16] %v306, 128
          %v552 = vpop.trf.xlu0
          %v553 = vpop.trf.xlu0
          %v554 = vpop.trf.xlu0
          %v555 = vpop.trf.xlu0
          %v556 = vpop.trf.xlu0
          %v557 = vpop.trf.xlu0
          %v558 = vpop.trf.xlu0
          %v559 = vpop.trf.xlu0
          %v560 = vpop.trf.xlu0
          %v561 = vpop.trf.xlu0
          %v562 = vpop.trf.xlu0
          %v563 = vpop.trf.xlu0
          %v564 = vpop.trf.xlu0
          %v565 = vpop.trf.xlu0
          %v566 = vpop.trf.xlu0
          %v567 = vpop.trf.xlu0
          %568 = vmatprep.subr.mxu0 0.0
          %569 = vmatpush1.msra.mxu0 %v487
          %570 = vmatprep.subr.mxu0 0.0
          %571 = vmatpush1.msra.mxu0 %v486
          %572 = vmatprep.subr.mxu0 0.0
          %573 = vmatpush1.msra.mxu0 %v485
          %574 = vmatprep.subr.mxu0 0.0
          %575 = vmatpush1.msra.mxu0 %v484
          %576 = vmatprep.subr.mxu0 0.0
          %577 = vmatpush1.msra.mxu0 %v483
          %578 = vmatprep.subr.mxu0 0.0
          %579 = vmatpush1.msra.mxu0 %v482
          %580 = vmatprep.subr.mxu0 0.0
          %581 = vmatpush1.msra.mxu0 %v481
          %582 = vmatprep.subr.mxu0 0.0
          %583 = vmatpush1.msra.mxu0 %v480
          %584 = vmatprep.subr.mxu0 0.0
          %585 = vmatpush1.msra.mxu0 %v479
          %586 = vmatprep.subr.mxu0 0.0
          %587 = vmatpush1.msra.mxu0 %v478
          %588 = vmatprep.subr.mxu0 0.0
          %589 = vmatpush1.msra.mxu0 %v477
          %590 = vmatprep.subr.mxu0 0.0
          %591 = vmatpush1.msra.mxu0 %v476
          %592 = vmatprep.subr.mxu0 0.0
          %593 = vmatpush1.msra.mxu0 %v475
          %594 = vmatprep.subr.mxu0 0.0
          %595 = vmatpush1.msra.mxu0 %v474
          %596 = vmatprep.subr.mxu0 0.0
          %597 = vmatpush1.msra.mxu0 %v473
          %598 = vmatprep.subr.mxu0 0.0
          %599 = vmatpush1.msra.mxu0 %v472
          %600 = vmatprep.subr.mxu0 0.0
          %601 = vmatpush2.msra.mxu0 %v503
          %602 = vmatprep.subr.mxu0 0.0
          %603 = vmatpush2.msra.mxu0 %v502
          %604 = vmatprep.subr.mxu0 0.0
          %605 = vmatpush2.msra.mxu0 %v501
          %606 = vmatprep.subr.mxu0 0.0
          %607 = vmatpush2.msra.mxu0 %v500
          %608 = vmatprep.subr.mxu0 0.0
          %609 = vmatpush2.msra.mxu0 %v499
          %610 = vmatprep.subr.mxu0 0.0
          %611 = vmatpush2.msra.mxu0 %v498
          %612 = vmatprep.subr.mxu0 0.0
          %613 = vmatpush2.msra.mxu0 %v497
          %614 = vmatprep.subr.mxu0 0.0
          %615 = vmatpush2.msra.mxu0 %v496
          %616 = vmatprep.subr.mxu0 0.0
          %617 = vmatpush2.msra.mxu0 %v495
          %618 = vmatprep.subr.mxu0 0.0
          %619 = vmatpush2.msra.mxu0 %v494
          %620 = vmatprep.subr.mxu0 0.0
          %621 = vmatpush2.msra.mxu0 %v493
          %622 = vmatprep.subr.mxu0 0.0
          %623 = vmatpush2.msra.mxu0 %v492
          %624 = vmatprep.subr.mxu0 0.0
          %625 = vmatpush2.msra.mxu0 %v491
          %626 = vmatprep.subr.mxu0 0.0
          %627 = vmatpush2.msra.mxu0 %v490
          %628 = vmatprep.subr.mxu0 0.0
          %629 = vmatpush2.msra.mxu0 %v489
          %630 = vmatprep.subr.mxu0 0.0
          %631 = vmatpush2.msra.mxu0 %v488
          %632 = vmatprep.mubr.f32.mxu0 %v552
          %633 = vmatmul.mubr.f32.gmra.mxu0 %v520
          %v634 = vpop.f32.mrf.mxu0
          %v635 = vadd.f32 0.0, %v634
          %v636 = vpop.f32.mrf.mxu0
          %637 = vmatprep.mubr.f32.mxu0 %v553
          %638 = vmatmul.mubr.f32.gmra.mxu0 %v521
          %v639 = vpop.f32.mrf.mxu0
          %v640 = vadd.f32 0.0, %v639
          %v641 = vpop.f32.mrf.mxu0
          %642 = vmatprep.mubr.f32.mxu0 %v554
          %643 = vmatmul.mubr.f32.gmra.mxu0 %v522
          %v644 = vpop.f32.mrf.mxu0
          %v645 = vadd.f32 0.0, %v644
          %v646 = vpop.f32.mrf.mxu0
          %647 = vmatprep.mubr.f32.mxu0 %v555
          %648 = vmatmul.mubr.f32.gmra.mxu0 %v523
          %v649 = vpop.f32.mrf.mxu0
          %v650 = vadd.f32 0.0, %v649
          %v651 = vpop.f32.mrf.mxu0
          %652 = vmatprep.mubr.f32.mxu0 %v556
          %653 = vmatmul.mubr.f32.gmra.mxu0 %v524
          %v654 = vpop.f32.mrf.mxu0
          %v655 = vadd.f32 0.0, %v654
          %v656 = vpop.f32.mrf.mxu0
          %657 = vmatprep.mubr.f32.mxu0 %v557
          %658 = vmatmul.mubr.f32.gmra.mxu0 %v525
          %v659 = vpop.f32.mrf.mxu0
          %v660 = vadd.f32 0.0, %v659
          %v661 = vpop.f32.mrf.mxu0
          %662 = vmatprep.mubr.f32.mxu0 %v558
          %663 = vmatmul.mubr.f32.gmra.mxu0 %v526
          %v664 = vpop.f32.mrf.mxu0
          %v665 = vadd.f32 0.0, %v664
          %v666 = vpop.f32.mrf.mxu0
          %667 = vmatprep.mubr.f32.mxu0 %v559
          %668 = vmatmul.mubr.f32.gmra.mxu0 %v527
          %v669 = vpop.f32.mrf.mxu0
          %v670 = vadd.f32 0.0, %v669
          %v671 = vpop.f32.mrf.mxu0
          %672 = vdwg.mxu0
          %v673 = vld [vmem:[#allocation2] sm:$0xff]
          %v674 = vld [vmem:[#allocation2 + $0x8] sm:$0xff]
          %v675 = vld [vmem:[#allocation2 + $0x10] sm:$0xff]
          %v676 = vld [vmem:[#allocation2 + $0x18] sm:$0xff]
          %v677 = vld [vmem:[#allocation2 + $0x20] sm:$0xff]
          %v678 = vld [vmem:[#allocation2 + $0x28] sm:$0xff]
          %v679 = vld [vmem:[#allocation2 + $0x30] sm:$0xff]
          %v680 = vld [vmem:[#allocation2 + $0x38] sm:$0xff]
          %v681 = vadd.f32 %v673, %v635
          %v682 = vadd.f32 %v674, %v640
          %v683 = vadd.f32 %v675, %v645
          %v684 = vadd.f32 %v676, %v650
          %v685 = vadd.f32 %v677, %v655
          %v686 = vadd.f32 %v678, %v660
          %v687 = vadd.f32 %v679, %v665
          %v688 = vadd.f32 %v680, %v670
          %689 = vst [vmem:[#allocation2] sm:$0xff] %v681
          %690 = vst [vmem:[#allocation2 + $0x8] sm:$0xff] %v682
          %691 = vst [vmem:[#allocation2 + $0x10] sm:$0xff] %v683
          %692 = vst [vmem:[#allocation2 + $0x18] sm:$0xff] %v684
          %693 = vst [vmem:[#allocation2 + $0x20] sm:$0xff] %v685
          %694 = vst [vmem:[#allocation2 + $0x28] sm:$0xff] %v686
          %695 = vst [vmem:[#allocation2 + $0x30] sm:$0xff] %v687
          %696 = vst [vmem:[#allocation2 + $0x38] sm:$0xff] %v688
        $region36: #{tpu_custom_call.1} parent=27 // pred_fallthru
          _
        %p697 = scmp.eq.s32.totalorder %s30, 1
        // Predicated region
        $region37: #{tpu_custom_call.1} parent=27 // pred_check
          %p698 = pneg %p697
        $region38: #{tpu_custom_call.1} parent=27 // pred_check_branch
          %700 = sbr.rel (%p698) target = $region40
        $region39: #{tpu_custom_call.1} parent=27 // pred_region
          %v701 = vld [vmem:[#allocation2] sm:$0xff]
          %v702 = vld [vmem:[#allocation2 + $0x8] sm:$0xff]
          %v703 = vld [vmem:[#allocation2 + $0x10] sm:$0xff]
          %v704 = vld [vmem:[#allocation2 + $0x18] sm:$0xff]
          %v705 = vld [vmem:[#allocation2 + $0x20] sm:$0xff]
          %v706 = vld [vmem:[#allocation2 + $0x28] sm:$0xff]
          %v707 = vld [vmem:[#allocation2 + $0x30] sm:$0xff]
          %v708 = vld [vmem:[#allocation2 + $0x38] sm:$0xff]
          %709 = vst [vmem:[%s201] sm:$0xff] %v701
          %710 = vst [vmem:[%s201 + $0x8] sm:$0xff] %v702
          %711 = vst [vmem:[%s201 + $0x10] sm:$0xff] %v703
          %712 = vst [vmem:[%s201 + $0x18] sm:$0xff] %v704
          %713 = vst [vmem:[%s201 + $0x20] sm:$0xff] %v705
          %714 = vst [vmem:[%s201 + $0x28] sm:$0xff] %v706
          %715 = vst [vmem:[%s201 + $0x30] sm:$0xff] %v707
          %716 = vst [vmem:[%s201 + $0x38] sm:$0xff] %v708
        $region40: #{tpu_custom_call.1} parent=27 // pred_fallthru
          _
        %s717 = sand.u32 %s108, 1
        %s718 = scalar_lea.sflag [#allocation6], %s717
        %s719 = sand.u32 %s108, 1
        %s720 = smul.addr %s719, 64
        %s721 = scalar_lea.vmem [#allocation5], %s720
        // Predicated region
        $region41: #{tpu_custom_call.1} parent=27 // pred_check
          %p722 = pneg %p118
        $region42: #{tpu_custom_call.1} parent=27 // pred_check_branch
          %724 = sbr.rel (%p722) target = $region44
        $region43: #{tpu_custom_call.1} parent=27 // pred_region
          %s726 = ssub.s32 1024, 1024
          %727 = vsyncadd %s718, %s726
          %s728 = smul.addr %s28, 16
          %s729 = sadd.s32 %s29, %s728
          %s730 = smul.addr %s729, 128
          %s731 = scalar_lea.hbm %s3, %s730
          %s732 = sshll.u32 %s721, 4
          %s733 = int_to_ptr.vmem [resolvable:$true] %s732
          %738 = dma.vmem_to_hbm [thread:$0]  %s733, 1024, %s731, %s718, 128, 256, 8
        $region44: #{tpu_custom_call.1} parent=27 // pred_fallthru
          _
      $region28: #{tpu_custom_call.1} parent=5 // pred_fallthru
        _
      %p739 = scmp.le.s32.totalorder 2, %s18
      // Predicated region
      $region45: #{tpu_custom_call.1} parent=5 // pred_check
        %p740 = pneg %p739
      $region46: #{tpu_custom_call.1} parent=5 // pred_check_branch
        %742 = sbr.rel (%p740) target = $region48
      $region47: #{tpu_custom_call.1} parent=5 // pred_region
        %s743 = ssub.s32 %s18, 2
        // Predicated region
        $region49: #{tpu_custom_call.1} parent=47 // pred_check
          %p744 = pneg %p124
        $region50: #{tpu_custom_call.1} parent=47 // pred_check_branch
          %746 = sbr.rel (%p744) target = $region52
        $region51: #{tpu_custom_call.1} parent=47 // pred_region
          %s747 = sand.u32 %s109, 1
          %s748 = scalar_lea.sflag [#allocation6], %s747
          %s749 = sand.u32 %s109, 1
          %s750 = smul.addr %s749, 64
          %s751 = scalar_lea.vmem [#allocation5], %s750
          %752 = dma.done %s748, 1024
        $region52: #{tpu_custom_call.1} parent=47 // pred_fallthru
          _
      $region48: #{tpu_custom_call.1} parent=5 // pred_fallthru
        _
    $region6: #{tpu_custom_call.1} parent=1 // loop_footer
      %s22 = sadd.s32 1, %s18
    $region7: #{tpu_custom_call.1} parent=1 // loop_footer_branch
      %17 = sbr.rel target = $region3
    $region8: #{tpu_custom_call.1} parent=1 // loop_exit
      _
    %753 = vsyncpa [#allocation6], 1
    %s754 = scalar_lea.sflag [#allocation6], 1
    %755 = vsyncpa %s754, 1

</llo_original>
